<compile_context>
chip_gen: v7x
topology: tpu7x:2x2x1
jax: 0.10.0
libtpu: 0.0.40
codegen_flags: <defaults>
</compile_context>

<pallas_src>
import math

import jax
import jax.numpy as jnp
from jax.experimental import pallas as pl
from jax.experimental.pallas import tpu as pltpu

_MAX_LANE_WIDTH = 8192          # cap on the folded lane width
_MiB = 1024 * 1024


def _layer_scale_kernel(gamma_ref, x_ref, o_ref):
    # gamma_ref: (1, W) in the compute dtype (pre-cast in the wrapper), so this is a
    # single sublane-broadcast vmul (+ optional down-cast) per vreg — pure VPU filler
    # hidden under the HBM-stream DMA.
    o_ref[...] = (x_ref[...] * gamma_ref[...]).astype(o_ref.dtype)


def _vmem_budget_bytes():
    """Generation-aware budget for the double-buffered working set + scoped limit."""
    try:
        cap = int(pltpu.get_tpu_info().vmem_capacity_bytes)
    except Exception:               # conservative default: v7x-sized VMEM (64 MiB)
        cap = 64 * _MiB
    # Working-set budget: half of physical VMEM, capped at 48 MiB.
    #   v7x (64 MiB physical)   -> 32 MiB budget
    #   v5e/v6e (128 MiB)       -> 48 MiB budget  (v5e's 16 MiB scoped default is
    #                              overridden below via vmem_limit_bytes)
    budget = min(cap // 2, 48 * _MiB)
    # Scoped-VMEM limit requested from Mosaic: budget + headroom, below physical.
    limit = int(min(budget + 8 * _MiB, cap - 8 * _MiB))
    return budget, limit


def _pick_tm(R, W, in_itemsize, out_itemsize, budget_bytes):
    """Largest multiple-of-8 row tile whose 2x-buffered in+out footprint fits the
    budget; then force >= 2 balanced grid steps for mid/large tensors so both v7x
    TensorCores get work (an extra step costs ~0.35 us, a no-op on v5e/v6e)."""
    per_row = 2 * W * (in_itemsize + out_itemsize)       # double-buffered in + out
    tm_max = max(budget_bytes // per_row, 8)
    tm_max = max((tm_max // 8) * 8, 8)
    if tm_max >= R:
        tm_max = R

    n_steps = max(pl.cdiv(R, tm_max), 1)
    data_bytes = R * W * in_itemsize
    if R >= 16 and data_bytes >= 2 * _MiB:
        n_steps = max(n_steps, 2)
        if n_steps % 2:
            n_steps += 1                                  # balanced across 2 TCs
    tm = -(-R // n_steps)
    tm = max(((tm + 7) // 8) * 8, 8)                      # sublane multiple
    if tm >= R:
        tm = R                                            # full extent always legal
    return tm


def _stream_scale(x2d, gamma_row, out_dtype, budget, vmem_limit, alias_x=False):
    """One streaming pallas_call over a (R, W) slab with a resident gamma row."""
    R, W = x2d.shape
    tm = _pick_tm(R, W,
                  jnp.dtype(x2d.dtype).itemsize,
                  jnp.dtype(out_dtype).itemsize,
                  budget)
    grid = (pl.cdiv(R, tm),)

    kwargs = {}
    if alias_x and x2d.dtype == jnp.dtype(out_dtype):
        # Reuse x's HBM buffer for the output (effective only if the caller donates x).
        kwargs["input_output_aliases"] = {1: 0}

    return pl.pallas_call(
        _layer_scale_kernel,
        out_shape=jax.ShapeDtypeStruct((R, W), out_dtype),
        grid=grid,
        in_specs=[
            # gamma: constant block index every step -> DMA'd once, stays resident.
            pl.BlockSpec((1, W), lambda i: (0, 0)),
            # x: streamed row tiles, double-buffered by the Pallas pipeline.
            pl.BlockSpec((tm, W), lambda i: (i, 0)),
        ],
        out_specs=pl.BlockSpec((tm, W), lambda i: (i, 0)),
        compiler_params=pltpu.CompilerParams(
            dimension_semantics=("parallel",),      # shard row tiles across TCs (v7x)
            vmem_limit_bytes=vmem_limit,            # cover the large double-buffered blocks
        ),
        # TODO(synk): if the producer of x is itself a Pallas kernel, fuse this multiply
        # into its epilogue (or allow_input_fusion) instead of running it standalone.
        **kwargs,
    )(gamma_row, x2d)


def layer_scale(x: jax.Array, gamma: jax.Array, *, out_dtype=None,
                donate_x: bool = False) -> jax.Array:
    """out[..., d] = x[..., d] * gamma[d]  (PyTorch LayerScale.forward, non-inplace).

    out_dtype=None reproduces PyTorch promotion (bf16 x * f32 gamma -> f32 out);
    pass out_dtype=jnp.bfloat16 explicitly for the bandwidth-optimal bf16 output.
    """
    orig_shape = x.shape
    D = orig_shape[-1]
    assert gamma.shape == (D,), "gamma must have shape (dim,)"
    rows = math.prod(orig_shape[:-1]) if len(orig_shape) > 1 else 1

    if out_dtype is None:
        out_dtype = jnp.promote_types(x.dtype, gamma.dtype)
    out_dtype = jnp.dtype(out_dtype)
    compute_dtype = jnp.promote_types(x.dtype, out_dtype)
    gamma_c = gamma.astype(compute_dtype)       # pre-cast: kernel body is one vmul

    budget, vmem_limit = _vmem_budget_bytes()
    x2d = x.reshape(rows, D)

    # --- lane-dense layout: fold rows so the last dim is a multiple of 128 ------------
    rep = math.lcm(D, 128) // D
    can_fold = rep > 1 and rep * D <= _MAX_LANE_WIDTH

    if can_fold:
        W = rep * D
        gamma_row = jnp.tile(gamma_c, rep).reshape(1, W)   # period-D pattern, same semantics
        rows_main = (rows // rep) * rep

        if rows_main == rows:
            # Fully foldable: single lane-dense streaming call.
            out2d = _stream_scale(x2d.reshape(rows // rep, W), gamma_row,
                                  out_dtype, budget, vmem_limit, alias_x=donate_x)
            return out2d.reshape(orig_shape)

        if rows_main > 0:
            # Mixed case: keep >99% of rows on the lane-dense path; only the tiny
            # tail (< rep rows) uses narrow-lane stores.  The slice/concatenate at
            # the XLA boundary adds a pass over the data, but avoids masked
            # vst.msk stores for the bulk of the tensor.
            x_main = x2d[:rows_main].reshape(rows_main // rep, W)
            x_tail = x2d[rows_main:]
            out_main = _stream_scale(x_main, gamma_row, out_dtype, budget, vmem_limit)
            out_tail = pl.pallas_call(
                _layer_scale_kernel,
                out_shape=jax.ShapeDtypeStruct(x_tail.shape, out_dtype),
            )(gamma_c.reshape(1, D), x_tail)
            out2d = jnp.concatenate([out_main.reshape(rows_main, D), out_tail], axis=0)
            return out2d.reshape(orig_shape)
        # rows < rep: tiny tensor, fall through to the narrow-lane path.

    # D already a multiple of 128 (rep == 1), too wide to fold, or tiny tensor:
    # stream with lane width D (masked stores only if D % 128 != 0).
    out2d = _stream_scale(x2d, gamma_c.reshape(1, D), out_dtype, budget, vmem_limit,
                          alias_x=donate_x)
    return out2d.reshape(orig_shape)


if __name__ == "__main__":
    key = jax.random.PRNGKey(0)
    init_values = 1e-05

    # 1) Shapes implied by the module: (batch, seq, dim) with gamma of shape (dim,).
    B, N, D = 2, 8, 32
    gamma = init_values * jnp.ones((D,), dtype=jnp.float32)    # nn.Parameter(init * ones(dim))
    x = jax.random.normal(key, (B, N, D), dtype=jnp.float32)
    out = jax.block_until_ready(layer_scale(x, gamma))
    ref = x * gamma
    assert out.shape == ref.shape and out.dtype == ref.dtype
    assert jnp.allclose(out, ref, atol=1e-6, rtol=1e-6)

    # 2) Mixed precision, lane-dense hidden dim (mask2former-like D=256):
    #    bf16 activations, f32 gamma -> f32 output (PyTorch promotion).
    k2 = jax.random.PRNGKey(0)
    x_bf16 = jax.random.normal(k2, (4, 16, 256), dtype=jnp.bfloat16)
    gamma2 = init_values * jnp.ones((256,), dtype=jnp.float32)
    out2 = jax.block_until_ready(layer_scale(x_bf16, gamma2))
    ref2 = x_bf16.astype(jnp.float32) * gamma2
    assert out2.dtype == ref2.dtype and out2.shape == ref2.shape
    assert jnp.allclose(out2, ref2, atol=1e-6, rtol=1e-6)

    # 3) Explicit bf16-out override (bandwidth-optimal path, flag-gated semantics).
    out3 = jax.block_until_ready(layer_scale(x_bf16, gamma2, out_dtype=jnp.bfloat16))
    assert out3.dtype == jnp.bfloat16 and out3.shape == ref2.shape
    assert jnp.allclose(out3.astype(jnp.float32), ref2, rtol=2e-2, atol=1e-8)

    # 4) Row count not divisible by the fold factor -> main/tail split path.
    k3 = jax.random.PRNGKey(0)
    x_odd = jax.random.normal(k3, (3, 7, 32), dtype=jnp.float32)   # 21 rows, fold=4
    gamma3 = init_values * jnp.ones((32,), dtype=jnp.float32)
    out4 = jax.block_until_ready(layer_scale(x_odd, gamma3))
    assert jnp.allclose(out4, x_odd * gamma3, atol=1e-6, rtol=1e-6)

    # TODO(synk): the `inplace=True` (x.mul_) variant has no true in-place analog in JAX;
    # the closest equivalent is the optional donate_x=True buffer aliasing above.
    print("KERNEL_OK")
</pallas_src>

<mosaic_0001>
module attributes {stable_mosaic.version = 11 : i64} {
  func.func @_layer_scale_kernel(%arg0: i32, %arg1: memref<1x128xf32, #tpu.memory_space<vmem>>, %arg2: memref<4x128xf32, #tpu.memory_space<vmem>>, %arg3: memref<4x128xf32, #tpu.memory_space<vmem>>) attributes {dimension_semantics = [#tpu.dimension_semantics<parallel>], iteration_bounds = array<i64: 1>, scalar_prefetch = 0 : i64, scratch_operands = 0 : i64, tpu.core_type = #tpu.core_type<tc>, window_params = [{pipeline_mode = #tpu.pipeline_mode<synchronous>, transform_indices = @transform_0, window_bounds = array<i64: 1, 128>}, {transform_indices = @transform_1, window_bounds = array<i64: 4, 128>}, {transform_indices = @transform_2, window_bounds = array<i64: 4, 128>}]} {
    %c0 = arith.constant 0 : index
    %c0_0 = arith.constant 0 : index
    %0 = vector.load %arg2[%c0, %c0_0] : memref<4x128xf32, #tpu.memory_space<vmem>>, vector<4x128xf32>
    %c0_1 = arith.constant 0 : index
    %c0_2 = arith.constant 0 : index
    %1 = vector.load %arg1[%c0_1, %c0_2] : memref<1x128xf32, #tpu.memory_space<vmem>>, vector<1x128xf32>
    %2 = vector.broadcast %1 : vector<1x128xf32> to vector<4x128xf32>
    %3 = arith.mulf %0, %2 : vector<4x128xf32>
    %c0_3 = arith.constant 0 : index
    %c0_4 = arith.constant 0 : index
    %4 = vector.load %arg3[%c0_3, %c0_4] : memref<4x128xf32, #tpu.memory_space<vmem>>, vector<4x128xf32>
    tpu.vector_store %arg3[%c0_3, %c0_4], %3 {strides = array<i32>} : memref<4x128xf32, #tpu.memory_space<vmem>>, vector<4x128xf32>,
    return
  }
  func.func @transform_0(%arg0: i32) -> (i32, i32) {
    %c0_i32 = arith.constant 0 : i32
    %c0_i32_0 = arith.constant 0 : i32
    %c0_i32_1 = arith.constant 0 : i32
    return %c0_i32, %c0_i32_0 : i32, i32
  }
  func.func @transform_1(%arg0: i32) -> (i32, i32) {
    %c0_i32 = arith.constant 0 : i32
    %c0_i32_0 = arith.constant 0 : i32
    return %arg0, %c0_i32 : i32, i32
  }
  func.func @transform_2(%arg0: i32) -> (i32, i32) {
    %c0_i32 = arith.constant 0 : i32
    %c0_i32_0 = arith.constant 0 : i32
    return %arg0, %c0_i32 : i32, i32
  }
}

</mosaic_0001>

<llo_original>
// kernel: tpu_custom_call.1
$region0: #{tpu_custom_call.1}
  #allocation0 [shape = 'u32[]', space=smem, size = 0x4, offset = 0x4, fixed_abs, tag = 'smem constant byte address 0x4 - core index']
  #allocation1 [shape = 'u32[144,128]{1,0:T(1,128)}', space=vmem, size = 0x12000, scoped, tag = 'internal scratch']
  %s0 = inlined_call_operand.hbm [shape: f32[1,128], index: 0, kind: input, shape index: {}]
  %s1 = inlined_call_operand.hbm [shape: f32[4,128], index: 1, kind: input, shape index: {}]
  %s2 = inlined_call_operand.hbm [shape: f32[4,128], index: 2, kind: output, shape index: {}]
  %s3 = sld [smem:[#allocation0]]
  $region26: #{tpu_custom_call.1} parent=0
    _
  %s5 = ssub.s32 1, %s3
  %s6 = scalar_select 0, %s5, %s3
  $region1: #{tpu_custom_call.1} parent=0
    #allocation2 [shape = 'u8[512]{0}', space=vmem, size = 0x400, scoped, tag = 'input window, operand 0, single buffered']
    #allocation3 [shape = 's32[1]{0}', space=sflag, size = 0x4, scoped, tag = 'scoped memory for tpu_custom_call.1']
    #allocation4 [shape = 's32[1]{0}', space=sflag, size = 0x4, scoped, tag = 'scoped memory for tpu_custom_call.1']
    #allocation5 [shape = 'u8[2048]{0}', space=vmem, size = 0x800, scoped, tag = 'input window, operand 1, single buffered']
    #allocation6 [shape = 's32[1]{0}', space=sflag, size = 0x4, scoped, tag = 'scoped memory for tpu_custom_call.1']
    #allocation7 [shape = 'u8[2048]{0}', space=vmem, size = 0x800, scoped, tag = 'output window, operand 0, single buffered']
    %7 = vsyncpa [#allocation3], 0
    %8 = vsyncpa [#allocation6], 0
    %9 = vsyncpa [#allocation4], 0
    // Predicated region
    $region2: #{tpu_custom_call.1} parent=1 // pred_check
      _
    $region3: #{tpu_custom_call.1} parent=1 // pred_check_branch
      %11 = sbr.rel (0) target = $region5
    $region4: #{tpu_custom_call.1} parent=1 // pred_region
      %s13 = ssub.s32 16, 16
      %14 = vsyncadd [#allocation3], %s13
      %s16 = sshll.u32 [#allocation2], 4
      %s17 = int_to_ptr.vmem [resolvable:$true] %s16
      %19 = dma.hbm_to_vmem [thread:$0]  %s0, 16, %s17, [#allocation3]
    $region5: #{tpu_custom_call.1} parent=1 // pred_fallthru
      _
    // Predicated region
    $region6: #{tpu_custom_call.1} parent=1 // pred_check
      _
    $region7: #{tpu_custom_call.1} parent=1 // pred_check_branch
      %21 = sbr.rel (0) target = $region9
    $region8: #{tpu_custom_call.1} parent=1 // pred_region
      %s23 = ssub.s32 64, 64
      %24 = vsyncadd [#allocation6], %s23
      %s26 = sshll.u32 [#allocation5], 4
      %s27 = int_to_ptr.vmem [resolvable:$true] %s26
      %29 = dma.hbm_to_vmem [thread:$0]  %s1, 64, %s27, [#allocation6]
    $region9: #{tpu_custom_call.1} parent=1 // pred_fallthru
      _
    // Predicated region
    $region10: #{tpu_custom_call.1} parent=1 // pred_check
      _
    $region11: #{tpu_custom_call.1} parent=1 // pred_check_branch
      %31 = sbr.rel (0) target = $region13
    $region12: #{tpu_custom_call.1} parent=1 // pred_region
      %32 = dma.done [#allocation3], 16
    $region13: #{tpu_custom_call.1} parent=1 // pred_fallthru
      _
    // Predicated region
    $region14: #{tpu_custom_call.1} parent=1 // pred_check
      _
    $region15: #{tpu_custom_call.1} parent=1 // pred_check_branch
      %34 = sbr.rel (0) target = $region17
    $region16: #{tpu_custom_call.1} parent=1 // pred_region
      %35 = dma.done [#allocation6], 64
    $region17: #{tpu_custom_call.1} parent=1 // pred_fallthru
      _
    %v36 = vld [vmem:[#allocation5] sm:$0xf]
    %v37 = vld [vmem:[#allocation2] sm:$0x1]
    %v39 = vlaneseq
    %v40 = vshrl.u32 %v39, 7
    %v41 = vsub.s32 0, %v40
    %v42 = vrot.slane %v37, %v41
    %v44 = vmul.f32 %v36, %v42
    %45 = vst [vmem:[#allocation7] sm:$0xf] %v44
    // Predicated region
    $region18: #{tpu_custom_call.1} parent=1 // pred_check
      _
    $region19: #{tpu_custom_call.1} parent=1 // pred_check_branch
      %47 = sbr.rel (0) target = $region21
    $region20: #{tpu_custom_call.1} parent=1 // pred_region
      %s49 = ssub.s32 64, 64
      %50 = vsyncadd [#allocation4], %s49
      %s52 = sshll.u32 [#allocation7], 4
      %s53 = int_to_ptr.vmem [resolvable:$true] %s52
      %55 = dma.vmem_to_hbm [thread:$0]  %s53, 64, %s2, [#allocation4]
    $region21: #{tpu_custom_call.1} parent=1 // pred_fallthru
      _
    // Predicated region
    $region22: #{tpu_custom_call.1} parent=1 // pred_check
      _
    $region23: #{tpu_custom_call.1} parent=1 // pred_check_branch
      %57 = sbr.rel (0) target = $region25
    $region24: #{tpu_custom_call.1} parent=1 // pred_region
      %58 = dma.done [#allocation4], 64
    $region25: #{tpu_custom_call.1} parent=1 // pred_fallthru
      _
    %59 = vsyncpa [#allocation3], 1
    %60 = vsyncpa [#allocation6], 1
    %61 = vsyncpa [#allocation4], 1

</llo_original>
